<compile_context>
chip_gen: v5e
topology: v5e:2x2
jax: 0.10.0
libtpu: 0.0.40
codegen_flags: <defaults>
</compile_context>

<pallas_src>
import jax
import jax.numpy as jnp
from jax.experimental import pallas as pl
from jax.experimental.pallas import tpu as pltpu

_SUB = 8  # sublane rows per K-chunk (one f32 vreg row-group)


def _lane_chunk(B):
    # Per-chunk live set ~ B accumulators (8, LC) + e/w/x chunks + stats;
    # keep it comfortably under the 64-vreg register file.
    return 512 if B <= 4 else 256


def _fusion_kernel(x_ref, w_ref, o_ref):
    # x_ref: (B*K, TN) native-layout inputs (N lane-dense)
    # w_ref: (K,  TN) raw (pre-softmax) weights, N on lanes
    # o_ref: (B,  TN) fused output
    K, TN = w_ref.shape
    B = o_ref.shape[0]
    LC = min(_lane_chunk(B), TN)
    n_chunks = TN // LC            # wrapper guarantees TN % LC == 0

    n_full = K // _SUB
    k_full = [k * _SUB for k in range(n_full)]
    k_rem0 = n_full * _SUB
    k_rem = K - k_rem0

    for c in range(n_chunks):      # static offsets -> zero-cost ref views
        col = pl.ds(c * LC, LC)

        # --- column max over K: elementwise running max (VPU), one
        #     cross-sublane reduce (XLU) at the end of the chunk.
        if n_full:
            m8 = w_ref[pl.ds(0, _SUB), col]
            for k0 in k_full[1:]:
                m8 = jnp.maximum(m8, w_ref[pl.ds(k0, _SUB), col])
            m = jnp.max(m8, axis=0, keepdims=True)                  # (1, LC)
            if k_rem:
                m = jnp.maximum(
                    m, jnp.max(w_ref[pl.ds(k_rem0, k_rem), col],
                               axis=0, keepdims=True))
        else:
            m = jnp.max(w_ref[pl.ds(0, K), col], axis=0, keepdims=True)

        # --- single streaming pass over K: exp(w - m) computed once and used
        #     both for the denominator and for every batch image; sublane
        #     reductions deferred to once per (b, chunk).
        d8 = jnp.zeros((_SUB, LC), jnp.float32)
        a8 = [jnp.zeros((_SUB, LC), jnp.float32) for _ in range(B)]
        for k0 in k_full:
            e = jnp.exp(w_ref[pl.ds(k0, _SUB), col] - m)            # EUP
            d8 = d8 + e
            for b in range(B):
                a8[b] = a8[b] + x_ref[pl.ds(b * K + k0, _SUB), col] * e
        denom = jnp.sum(d8, axis=0, keepdims=True)                  # (1, LC)
        num = [jnp.sum(a8[b], axis=0, keepdims=True) for b in range(B)]
        if k_rem:  # K % 8 tail (unaligned sublane slice; perf-only)
            e = jnp.exp(w_ref[pl.ds(k_rem0, k_rem), col] - m)
            denom = denom + jnp.sum(e, axis=0, keepdims=True)
            for b in range(B):
                num[b] = num[b] + jnp.sum(
                    x_ref[pl.ds(b * K + k_rem0, k_rem), col] * e,
                    axis=0, keepdims=True)

        inv = pl.reciprocal(denom, approx=False)   # exact: keeps 1e-5 rtol
        for b in range(B):
            o_ref[pl.ds(b, 1), col] = (num[b] * inv).astype(o_ref.dtype)


def _round_up(x, m):
    return (x + m - 1) // m * m


def _choose_tile(N, B, K, *, target_block_bytes=6 << 20, max_tn=16384,
                 vmem_block_budget=40 << 20):
    """Lane tile TN: multiple of 128 (and of the in-kernel lane chunk),
    sized toward ~6 MiB of streamed data per grid step, capped so two
    in-flight (double-buffered) blocks fit comfortably in scoped VMEM."""
    bytes_per_col = (B * K + K + B) * 4          # x + w + out columns (f32)
    n128 = _round_up(N, 128)
    tn = target_block_bytes // bytes_per_col
    tn = min(tn, vmem_block_budget // (2 * bytes_per_col), max_tn, n128)
    tn = max(128, (tn // 128) * 128)
    # Keep >= 4 grid steps when the problem is big enough: the "parallel"
    # N axis can then be sharded across v7x's two TensorCores while each core
    # still double-buffers.  Costs at most a few ~0.35us extra steps on
    # single-TC chips (v5e/v6e) for small N.
    if n128 >= 4 * 128:
        tn = min(tn, max(128, _round_up(pl.cdiv(n128, 4), 128)))
    # Align to the in-kernel lane-chunk size so chunks tile the block exactly.
    lc = min(_lane_chunk(B), tn)
    tn = max(lc, (tn // lc) * lc)
    return tn


def pixelwise_linear_fusion(inputs, weights):
    """inputs: (B, K, H, W, C); weights: (H, W, C, K) raw (pre-softmax).
    Returns fused: (B, H, W, C)."""
    B, K, H, W, C = inputs.shape
    assert weights.shape == (H, W, C, K)
    N = H * W * C

    # Free reshape of the native layout (contiguous dims merge) -> (B*K, N).
    x = inputs.reshape(B * K, N)
    # Only the small weight tensor is transposed so that N is on the lane axis.
    # TODO(synk): for tiny batches this (N,K)->(K,N) transpose is its own HBM
    # pass; cache w_t across calls when the weights are a reused parameter.
    w_t = jnp.transpose(weights.reshape(N, K), (1, 0))              # (K, N)

    tn = _choose_tile(N, B, K)
    grid = (pl.cdiv(N, tn),)   # no input padding: last block may be partial

    out = pl.pallas_call(
        _fusion_kernel,
        out_shape=jax.ShapeDtypeStruct((B, N), inputs.dtype),
        grid_spec=pltpu.PrefetchScalarGridSpec(
            num_scalar_prefetch=0,
            grid=grid,
            in_specs=[
                pl.BlockSpec((B * K, tn), lambda i: (0, i)),
                pl.BlockSpec((K, tn), lambda i: (0, i)),
            ],
            out_specs=pl.BlockSpec((B, tn), lambda i: (0, i)),
        ),
        compiler_params=pltpu.CompilerParams(
            dimension_semantics=("parallel",),
            # Double-buffered blocks stay well under ~14 MiB; 48 MiB scoped
            # limit is safe on v5e/v6e (128 MiB) and v7x (64 MiB per TC).
            vmem_limit_bytes=48 << 20,
        ),
    )(x, w_t)

    return out.reshape(B, H, W, C)


def init_weights(key, H, W, C, K):
    # Matches: ones(H,W,C,K)/K + randn*0.01 (deterministic via PRNGKey)
    uniform = jnp.ones((H, W, C, K), jnp.float32) / K
    noise = jax.random.normal(key, (H, W, C, K), jnp.float32) * 0.01
    return uniform + noise


def reference(inputs, weights):
    x = jnp.transpose(inputs, (0, 2, 3, 4, 1))             # (B,H,W,C,K)
    sw = jax.nn.softmax(weights, axis=-1)                   # (H,W,C,K)
    return jnp.sum(x * sw[None], axis=-1)                   # (B,H,W,C)


if __name__ == "__main__":
    # small shapes consistent with the module's forward
    B, K, H, W, C = 2, 32, 16, 16, 4

    key = jax.random.PRNGKey(0)
    k_w, k_x = jax.random.split(key)

    weights = init_weights(k_w, H, W, C, K)
    inputs = jax.random.normal(k_x, (B, K, H, W, C), jnp.float32)

    fused = jax.block_until_ready(pixelwise_linear_fusion(inputs, weights))
    ref = jax.block_until_ready(reference(inputs, weights))

    assert fused.shape == (B, H, W, C)
    assert jnp.allclose(fused, ref, atol=1e-5, rtol=1e-5)

    print("KERNEL_OK")
</pallas_src>

<mosaic_0001>
module attributes {stable_mosaic.version = 11 : i64} {
  func.func @_fusion_kernel(%arg0: i32, %arg1: memref<64x256xf32, #tpu.memory_space<vmem>>, %arg2: memref<32x256xf32, #tpu.memory_space<vmem>>, %arg3: memref<2x256xf32, #tpu.memory_space<vmem>>) attributes {dimension_semantics = [#tpu.dimension_semantics<parallel>], iteration_bounds = array<i64: 4>, scalar_prefetch = 0 : i64, scratch_operands = 0 : i64, tpu.core_type = #tpu.core_type<tc>, window_params = [{transform_indices = @transform_0, window_bounds = array<i64: 64, 256>}, {transform_indices = @transform_1, window_bounds = array<i64: 32, 256>}, {transform_indices = @transform_2, window_bounds = array<i64: 2, 256>}]} {
    %c0 = arith.constant 0 : index
    %c0_0 = arith.constant 0 : index
    %0 = vector.load %arg2[%c0, %c0_0] : memref<32x256xf32, #tpu.memory_space<vmem>>, vector<8x256xf32>
    %c8 = arith.constant 8 : index
    %c0_1 = arith.constant 0 : index
    %1 = vector.load %arg2[%c8, %c0_1] : memref<32x256xf32, #tpu.memory_space<vmem>>, vector<8x256xf32>
    %2 = arith.maximumf %0, %1 : vector<8x256xf32>
    %c16 = arith.constant 16 : index
    %c0_2 = arith.constant 0 : index
    %3 = vector.load %arg2[%c16, %c0_2] : memref<32x256xf32, #tpu.memory_space<vmem>>, vector<8x256xf32>
    %4 = arith.maximumf %2, %3 : vector<8x256xf32>
    %c24 = arith.constant 24 : index
    %c0_3 = arith.constant 0 : index
    %5 = vector.load %arg2[%c24, %c0_3] : memref<32x256xf32, #tpu.memory_space<vmem>>, vector<8x256xf32>
    %6 = arith.maximumf %4, %5 : vector<8x256xf32>
    %cst = arith.constant dense<0xFF800000> : vector<256xf32>
    %7 = vector.multi_reduction <maximumf>, %6, %cst [0] : vector<8x256xf32> to vector<256xf32>
    %8 = vector.shape_cast %7 : vector<256xf32> to vector<1x256xf32>
    %cst_4 = arith.constant 0.000000e+00 : f32
    %9 = vector.broadcast %cst_4 : f32 to vector<8x256xf32>
    %cst_5 = arith.constant 0.000000e+00 : f32
    %10 = vector.broadcast %cst_5 : f32 to vector<8x256xf32>
    %cst_6 = arith.constant 0.000000e+00 : f32
    %11 = vector.broadcast %cst_6 : f32 to vector<8x256xf32>
    %c0_7 = arith.constant 0 : index
    %c0_8 = arith.constant 0 : index
    %12 = vector.load %arg2[%c0_7, %c0_8] : memref<32x256xf32, #tpu.memory_space<vmem>>, vector<8x256xf32>
    %13 = vector.broadcast %8 : vector<1x256xf32> to vector<8x256xf32>
    %14 = arith.subf %12, %13 : vector<8x256xf32>
    %15 = math.exp %14 : vector<8x256xf32>
    %16 = arith.addf %9, %15 : vector<8x256xf32>
    %c0_9 = arith.constant 0 : index
    %c0_10 = arith.constant 0 : index
    %17 = vector.load %arg1[%c0_9, %c0_10] : memref<64x256xf32, #tpu.memory_space<vmem>>, vector<8x256xf32>
    %18 = arith.mulf %17, %15 : vector<8x256xf32>
    %19 = arith.addf %10, %18 : vector<8x256xf32>
    %c32 = arith.constant 32 : index
    %c0_11 = arith.constant 0 : index
    %20 = vector.load %arg1[%c32, %c0_11] : memref<64x256xf32, #tpu.memory_space<vmem>>, vector<8x256xf32>
    %21 = arith.mulf %20, %15 : vector<8x256xf32>
    %22 = arith.addf %11, %21 : vector<8x256xf32>
    %c8_12 = arith.constant 8 : index
    %c0_13 = arith.constant 0 : index
    %23 = vector.load %arg2[%c8_12, %c0_13] : memref<32x256xf32, #tpu.memory_space<vmem>>, vector<8x256xf32>
    %24 = vector.broadcast %8 : vector<1x256xf32> to vector<8x256xf32>
    %25 = arith.subf %23, %24 : vector<8x256xf32>
    %26 = math.exp %25 : vector<8x256xf32>
    %27 = arith.addf %16, %26 : vector<8x256xf32>
    %c8_14 = arith.constant 8 : index
    %c0_15 = arith.constant 0 : index
    %28 = vector.load %arg1[%c8_14, %c0_15] : memref<64x256xf32, #tpu.memory_space<vmem>>, vector<8x256xf32>
    %29 = arith.mulf %28, %26 : vector<8x256xf32>
    %30 = arith.addf %19, %29 : vector<8x256xf32>
    %c40 = arith.constant 40 : index
    %c0_16 = arith.constant 0 : index
    %31 = vector.load %arg1[%c40, %c0_16] : memref<64x256xf32, #tpu.memory_space<vmem>>, vector<8x256xf32>
    %32 = arith.mulf %31, %26 : vector<8x256xf32>
    %33 = arith.addf %22, %32 : vector<8x256xf32>
    %c16_17 = arith.constant 16 : index
    %c0_18 = arith.constant 0 : index
    %34 = vector.load %arg2[%c16_17, %c0_18] : memref<32x256xf32, #tpu.memory_space<vmem>>, vector<8x256xf32>
    %35 = vector.broadcast %8 : vector<1x256xf32> to vector<8x256xf32>
    %36 = arith.subf %34, %35 : vector<8x256xf32>
    %37 = math.exp %36 : vector<8x256xf32>
    %38 = arith.addf %27, %37 : vector<8x256xf32>
    %c16_19 = arith.constant 16 : index
    %c0_20 = arith.constant 0 : index
    %39 = vector.load %arg1[%c16_19, %c0_20] : memref<64x256xf32, #tpu.memory_space<vmem>>, vector<8x256xf32>
    %40 = arith.mulf %39, %37 : vector<8x256xf32>
    %41 = arith.addf %30, %40 : vector<8x256xf32>
    %c48 = arith.constant 48 : index
    %c0_21 = arith.constant 0 : index
    %42 = vector.load %arg1[%c48, %c0_21] : memref<64x256xf32, #tpu.memory_space<vmem>>, vector<8x256xf32>
    %43 = arith.mulf %42, %37 : vector<8x256xf32>
    %44 = arith.addf %33, %43 : vector<8x256xf32>
    %c24_22 = arith.constant 24 : index
    %c0_23 = arith.constant 0 : index
    %45 = vector.load %arg2[%c24_22, %c0_23] : memref<32x256xf32, #tpu.memory_space<vmem>>, vector<8x256xf32>
    %46 = vector.broadcast %8 : vector<1x256xf32> to vector<8x256xf32>
    %47 = arith.subf %45, %46 : vector<8x256xf32>
    %48 = math.exp %47 : vector<8x256xf32>
    %49 = arith.addf %38, %48 : vector<8x256xf32>
    %c24_24 = arith.constant 24 : index
    %c0_25 = arith.constant 0 : index
    %50 = vector.load %arg1[%c24_24, %c0_25] : memref<64x256xf32, #tpu.memory_space<vmem>>, vector<8x256xf32>
    %51 = arith.mulf %50, %48 : vector<8x256xf32>
    %52 = arith.addf %41, %51 : vector<8x256xf32>
    %c56 = arith.constant 56 : index
    %c0_26 = arith.constant 0 : index
    %53 = vector.load %arg1[%c56, %c0_26] : memref<64x256xf32, #tpu.memory_space<vmem>>, vector<8x256xf32>
    %54 = arith.mulf %53, %48 : vector<8x256xf32>
    %55 = arith.addf %44, %54 : vector<8x256xf32>
    %cst_27 = arith.constant dense<0.000000e+00> : vector<256xf32>
    %56 = vector.multi_reduction <add>, %49, %cst_27 [0] : vector<8x256xf32> to vector<256xf32>
    %57 = vector.shape_cast %56 : vector<256xf32> to vector<1x256xf32>
    %cst_28 = arith.constant dense<0.000000e+00> : vector<256xf32>
    %58 = vector.multi_reduction <add>, %52, %cst_28 [0] : vector<8x256xf32> to vector<256xf32>
    %59 = vector.shape_cast %58 : vector<256xf32> to vector<1x256xf32>
    %cst_29 = arith.constant dense<0.000000e+00> : vector<256xf32>
    %60 = vector.multi_reduction <add>, %55, %cst_29 [0] : vector<8x256xf32> to vector<256xf32>
    %61 = vector.shape_cast %60 : vector<256xf32> to vector<1x256xf32>
    %62 = tpu.reciprocal %57 : vector<1x256xf32> -> vector<1x256xf32>
    %63 = arith.mulf %59, %62 : vector<1x256xf32>
    %c0_30 = arith.constant 0 : index
    %c0_31 = arith.constant 0 : index
    %64 = vector.load %arg3[%c0_30, %c0_31] : memref<2x256xf32, #tpu.memory_space<vmem>>, vector<1x256xf32>
    tpu.vector_store %arg3[%c0_30, %c0_31], %63 {strides = array<i32>} : memref<2x256xf32, #tpu.memory_space<vmem>>, vector<1x256xf32>,
    %65 = arith.mulf %61, %62 : vector<1x256xf32>
    %c1 = arith.constant 1 : index
    %c0_32 = arith.constant 0 : index
    %66 = vector.load %arg3[%c1, %c0_32] : memref<2x256xf32, #tpu.memory_space<vmem>>, vector<1x256xf32>
    tpu.vector_store %arg3[%c1, %c0_32], %65 {strides = array<i32>} : memref<2x256xf32, #tpu.memory_space<vmem>>, vector<1x256xf32>,
    return
  }
  func.func @transform_0(%arg0: i32) -> (i32, i32) {
    %c0_i32 = arith.constant 0 : i32
    %c0_i32_0 = arith.constant 0 : i32
    return %c0_i32, %arg0 : i32, i32
  }
  func.func @transform_1(%arg0: i32) -> (i32, i32) {
    %c0_i32 = arith.constant 0 : i32
    %c0_i32_0 = arith.constant 0 : i32
    return %c0_i32, %arg0 : i32, i32
  }
  func.func @transform_2(%arg0: i32) -> (i32, i32) {
    %c0_i32 = arith.constant 0 : i32
    %c0_i32_0 = arith.constant 0 : i32
    return %c0_i32, %arg0 : i32, i32
  }
}

</mosaic_0001>

<llo_original>
// kernel: tpu_custom_call.1
$region0: #{tpu_custom_call.1}
  #allocation0 [shape = 'u32[]', space=smem, size = 0x4, offset = 0x4, fixed_abs, tag = 'smem constant byte address 0x4 - core index']
  #allocation1 [shape = 'u32[72,128]{1,0:T(1,128)}', space=vmem, size = 0x9000, scoped, tag = 'internal scratch']
  %s0 = inlined_call_operand.hbm [shape: f32[64,1024], index: 0, kind: input, shape index: {}]
  %s1 = inlined_call_operand.hbm [shape: f32[32,1024], index: 1, kind: input, shape index: {}]
  %s2 = inlined_call_operand.hbm [shape: f32[2,1024], index: 2, kind: output, shape index: {}]
  %s3 = sld [smem:[#allocation0]]
  $region49: #{tpu_custom_call.1} parent=0
    _
  %s5 = ssub.s32 1, %s3
  %s6 = scalar_select 0, %s5, %s3
  $region1: #{tpu_custom_call.1} parent=0
    #allocation2 [shape = 'u8[131072]{0}', space=vmem, size = 0x20000, scoped, tag = 'input window, operand 0']
    #allocation3 [shape = 's32[2]{0}', space=sflag, size = 0x8, scoped, tag = 'scoped memory for tpu_custom_call.1']
    #allocation4 [shape = 's32[2]{0}', space=sflag, size = 0x8, scoped, tag = 'scoped memory for tpu_custom_call.1']
    #allocation5 [shape = 'u8[65536]{0}', space=vmem, size = 0x10000, scoped, tag = 'input window, operand 1']
    #allocation6 [shape = 's32[2]{0}', space=sflag, size = 0x8, scoped, tag = 'scoped memory for tpu_custom_call.1']
    #allocation7 [shape = 'u8[4096]{0}', space=vmem, size = 0x1000, scoped, tag = 'output window, operand 0']
    %7 = vsyncpa [#allocation3], 0
    %s8 = scalar_lea.sflag [#allocation3], 1
    %9 = vsyncpa %s8, 0
    %10 = vsyncpa [#allocation6], 0
    %s11 = scalar_lea.sflag [#allocation6], 1
    %12 = vsyncpa %s11, 0
    %13 = vsyncpa [#allocation4], 0
    %s14 = scalar_lea.sflag [#allocation4], 1
    %15 = vsyncpa %s14, 0
    loop: start=0, step=1, limit=6
    $region2: #{tpu_custom_call.1} parent=1 // loop_pre_header
      _
    $region3: #{tpu_custom_call.1} parent=1 // loop_header
      %s17 = sphi 0, %s21
      %p18 = scmp.ge.s32.totalorder %s17, 6
      %s27 = sphi 0, %s29
      %s30 = sphi 0, %s27
      %s31 = sphi 0, %s30
      %s47 = sphi 0, %s31
      %s53 = sphi 0, %s55
      %s56 = sphi 0, %s53
      %s57 = sphi 0, %s56
      %s73 = sphi 0, %s57
      %s79 = sphi 0, %s81
      %s82 = sphi 0, %s79
      %s83 = sphi 0, %s82
      %s99 = sphi 0, %s83
    $region4: #{tpu_custom_call.1} parent=1 // loop_header_branch
      %20 = sbr.rel (%p18) target = $region8
    $region5: #{tpu_custom_call.1} parent=1 // loop_body
      %s22 = ssub.s32 %s17, 1
      %s23 = ssub.s32 %s17, 2
      %s24 = sadd.s32 %s17, 1
      %s25 = ssub.s32 %s17, %s24
      %p26 = scmp.eq.s32.totalorder %s25, 0
      %s28 = sadd.s32 %s27, 1
      %s29 = scalar_select %p26, %s27, %s28
      %p32 = pneg %p26
      %p33 = scmp.eq.s32.totalorder %s17, 3
      %p34 = por %p32, %p33
      %p35 = scmp.ne.s32.totalorder %s27, %s30
      %p36 = scmp.eq.s32.totalorder %s17, 0
      %p37 = por %p35, %p36
      %p38 = scmp.ne.s32.totalorder %s27, %s30
      %p39 = scmp.eq.s32.totalorder %s22, 3
      %p40 = por %p38, %p39
      %p41 = scmp.ne.s32.totalorder %s30, %s31
      %p42 = scmp.eq.s32.totalorder %s22, 0
      %p43 = por %p41, %p42
      %p44 = scmp.ne.s32.totalorder %s30, %s31
      %p45 = scmp.eq.s32.totalorder %s23, 3
      %p46 = por %p44, %p45
      %p48 = scmp.ne.s32.totalorder %s31, %s47
      %p49 = scmp.eq.s32.totalorder %s23, 0
      %p50 = por %p48, %p49
      %s51 = ssub.s32 %s17, %s24
      %p52 = scmp.eq.s32.totalorder %s51, 0
      %s54 = sadd.s32 %s53, 1
      %s55 = scalar_select %p52, %s53, %s54
      %p58 = pneg %p52
      %p59 = scmp.eq.s32.totalorder %s17, 3
      %p60 = por %p58, %p59
      %p61 = scmp.ne.s32.totalorder %s53, %s56
      %p62 = scmp.eq.s32.totalorder %s17, 0
      %p63 = por %p61, %p62
      %p64 = scmp.ne.s32.totalorder %s53, %s56
      %p65 = scmp.eq.s32.totalorder %s22, 3
      %p66 = por %p64, %p65
      %p67 = scmp.ne.s32.totalorder %s56, %s57
      %p68 = scmp.eq.s32.totalorder %s22, 0
      %p69 = por %p67, %p68
      %p70 = scmp.ne.s32.totalorder %s56, %s57
      %p71 = scmp.eq.s32.totalorder %s23, 3
      %p72 = por %p70, %p71
      %p74 = scmp.ne.s32.totalorder %s57, %s73
      %p75 = scmp.eq.s32.totalorder %s23, 0
      %p76 = por %p74, %p75
      %s77 = ssub.s32 %s17, %s24
      %p78 = scmp.eq.s32.totalorder %s77, 0
      %s80 = sadd.s32 %s79, 1
      %s81 = scalar_select %p78, %s79, %s80
      %p84 = pneg %p78
      %p85 = scmp.eq.s32.totalorder %s17, 3
      %p86 = por %p84, %p85
      %p87 = scmp.ne.s32.totalorder %s79, %s82
      %p88 = scmp.eq.s32.totalorder %s17, 0
      %p89 = por %p87, %p88
      %p90 = scmp.ne.s32.totalorder %s79, %s82
      %p91 = scmp.eq.s32.totalorder %s22, 3
      %p92 = por %p90, %p91
      %p93 = scmp.ne.s32.totalorder %s82, %s83
      %p94 = scmp.eq.s32.totalorder %s22, 0
      %p95 = por %p93, %p94
      %p96 = scmp.ne.s32.totalorder %s82, %s83
      %p97 = scmp.eq.s32.totalorder %s23, 3
      %p98 = por %p96, %p97
      %p100 = scmp.ne.s32.totalorder %s83, %s99
      %p101 = scmp.eq.s32.totalorder %s23, 0
      %p102 = por %p100, %p101
      %p103 = scmp.le.s32.totalorder 1, %s17
      %p104 = scmp.lt.s32.totalorder %s17, 5
      %p105 = pnand %p103, %p104
      %p106 = pneg %p105
      // Predicated region
      $region9: #{tpu_custom_call.1} parent=5 // pred_check
        _
      $region10: #{tpu_custom_call.1} parent=5 // pred_check_branch
        %108 = sbr.rel (%p105) target = $region12
      $region11: #{tpu_custom_call.1} parent=5 // pred_region
        %s109 = ssub.s32 %s17, 1
      $region12: #{tpu_custom_call.1} parent=5 // pred_fallthru
        _
      %p110 = scmp.lt.s32.totalorder %s17, 4
      // Predicated region
      $region13: #{tpu_custom_call.1} parent=5 // pred_check
        %p111 = pneg %p110
      $region14: #{tpu_custom_call.1} parent=5 // pred_check_branch
        %113 = sbr.rel (%p111) target = $region16
      $region15: #{tpu_custom_call.1} parent=5 // pred_region
        // Predicated region
        $region17: #{tpu_custom_call.1} parent=15 // pred_check
          %p114 = pneg %p37
        $region18: #{tpu_custom_call.1} parent=15 // pred_check_branch
          %116 = sbr.rel (%p114) target = $region20
        $region19: #{tpu_custom_call.1} parent=15 // pred_region
          %s117 = sand.u32 %s27, 1
          %s118 = scalar_lea.sflag [#allocation3], %s117
          %s119 = sand.u32 %s27, 1
          %s120 = smul.addr %s119, 128
          %s121 = scalar_lea.vmem [#allocation2], %s120
          %s122 = smul.u32 2, %s17
          %124 = vsyncadd %s118, 0
          %s125 = smul.addr %s122, 8
          %s126 = scalar_lea.hbm %s0, %s125
          %s127 = sshll.u32 %s126, 4
          %s128 = int_to_ptr.hbm [resolvable:$true] %s127
          %s129 = sshll.u32 %s121, 4
          %s130 = int_to_ptr.vmem [resolvable:$true] %s129
          %135 = dma.hbm_to_vmem [thread:$0]  %s128, 2048, %s130, %s118, 1024, 256, 16
        $region20: #{tpu_custom_call.1} parent=15 // pred_fallthru
          _
        // Predicated region
        $region21: #{tpu_custom_call.1} parent=15 // pred_check
          %p136 = pneg %p63
        $region22: #{tpu_custom_call.1} parent=15 // pred_check_branch
          %138 = sbr.rel (%p136) target = $region24
        $region23: #{tpu_custom_call.1} parent=15 // pred_region
          %s139 = sand.u32 %s53, 1
          %s140 = scalar_lea.sflag [#allocation6], %s139
          %s141 = sand.u32 %s53, 1
          %s142 = smul.addr %s141, 64
          %s143 = scalar_lea.vmem [#allocation5], %s142
          %s144 = smul.u32 2, %s17
          %146 = vsyncadd %s140, 0
          %s147 = smul.addr %s144, 8
          %s148 = scalar_lea.hbm %s1, %s147
          %s149 = sshll.u32 %s148, 4
          %s150 = int_to_ptr.hbm [resolvable:$true] %s149
          %s151 = sshll.u32 %s143, 4
          %s152 = int_to_ptr.vmem [resolvable:$true] %s151
          %157 = dma.hbm_to_vmem [thread:$0]  %s150, 1024, %s152, %s140, 1024, 256, 16
        $region24: #{tpu_custom_call.1} parent=15 // pred_fallthru
          _
      $region16: #{tpu_custom_call.1} parent=5 // pred_fallthru
        _
      %p158 = scmp.le.s32.totalorder 1, %s17
      %p159 = scmp.lt.s32.totalorder %s17, 5
      %p160 = pnand %p158, %p159
      %p161 = pneg %p160
      // Predicated region
      $region25: #{tpu_custom_call.1} parent=5 // pred_check
        _
      $region26: #{tpu_custom_call.1} parent=5 // pred_check_branch
        %163 = sbr.rel (%p160) target = $region28
      $region27: #{tpu_custom_call.1} parent=5 // pred_region
        %s164 = ssub.s32 %s17, 1
        %s165 = sand.u32 %s30, 1
        %s166 = scalar_lea.sflag [#allocation3], %s165
        %s167 = sand.u32 %s30, 1
        %s168 = smul.addr %s167, 128
        %s169 = scalar_lea.vmem [#allocation2], %s168
        // Predicated region
        $region29: #{tpu_custom_call.1} parent=27 // pred_check
          %p170 = pneg %p43
        $region30: #{tpu_custom_call.1} parent=27 // pred_check_branch
          %172 = sbr.rel (%p170) target = $region32
        $region31: #{tpu_custom_call.1} parent=27 // pred_region
          %174 = dma.done %s166, 2048
        $region32: #{tpu_custom_call.1} parent=27 // pred_fallthru
          _
        %s175 = sand.u32 %s56, 1
        %s176 = scalar_lea.sflag [#allocation6], %s175
        %s177 = sand.u32 %s56, 1
        %s178 = smul.addr %s177, 64
        %s179 = scalar_lea.vmem [#allocation5], %s178
        // Predicated region
        $region33: #{tpu_custom_call.1} parent=27 // pred_check
          %p180 = pneg %p69
        $region34: #{tpu_custom_call.1} parent=27 // pred_check_branch
          %182 = sbr.rel (%p180) target = $region36
        $region35: #{tpu_custom_call.1} parent=27 // pred_region
          %184 = dma.done %s176, 1024
        $region36: #{tpu_custom_call.1} parent=27 // pred_fallthru
          _
        %s185 = sand.u32 %s30, 1
        %s186 = scalar_lea.sflag [#allocation3], %s185
        %s187 = sand.u32 %s30, 1
        %s188 = smul.addr %s187, 128
        %s189 = scalar_lea.vmem [#allocation2], %s188
        %p190 = pneg %p43
        %p191 = pneg %p40
        %s192 = sand.u32 %s56, 1
        %s193 = scalar_lea.sflag [#allocation6], %s192
        %s194 = sand.u32 %s56, 1
        %s195 = smul.addr %s194, 64
        %s196 = scalar_lea.vmem [#allocation5], %s195
        %p197 = pneg %p69
        %p198 = pneg %p66
        %p199 = pneg %p95
        %p200 = pneg %p92
        %s201 = sand.u32 %s82, 1
        %s202 = scalar_lea.sflag [#allocation4], %s201
        %s203 = sand.u32 %s82, 1
        %s204 = smul.addr %s203, 4
        %s205 = scalar_lea.vmem [#allocation7], %s204
        %s206 = smul.u32 2, %s22
        %s207 = smul.u32 2, %s22
        %s208 = smul.u32 2, %s22
        %v209 = vld [vmem:[%s179] sm:$0xff]
        %v210 = vld [vmem:[%s179 + $0x8] sm:$0xff]
        %v211 = vld [vmem:[%s179 + $0x10] sm:$0xff]
        %v212 = vld [vmem:[%s179 + $0x18] sm:$0xff]
        %v213 = vmax.f32 %v209, %v211
        %v214 = vmax.f32 %v210, %v212
        %v215 = vld [vmem:[%s179 + $0x20] sm:$0xff]
        %v216 = vld [vmem:[%s179 + $0x28] sm:$0xff]
        %v217 = vmax.f32 %v213, %v215
        %v218 = vmax.f32 %v214, %v216
        %v219 = vld [vmem:[%s179 + $0x30] sm:$0xff]
        %v220 = vld [vmem:[%s179 + $0x38] sm:$0xff]
        %v221 = vmax.f32 %v217, %v219
        %v222 = vmax.f32 %v218, %v220
        %v223 = vrot.slane %v221, 4
        %v224 = vmax.f32 %v221, %v223
        %v225 = vrot.slane %v224, 2
        %v226 = vmax.f32 %v224, %v225
        %v227 = vrot.slane %v226, 1
        %v228 = vmax.f32 %v226, %v227
        %v229 = vrot.slane %v222, 4
        %v230 = vmax.f32 %v222, %v229
        %v231 = vrot.slane %v230, 2
        %v232 = vmax.f32 %v230, %v231
        %v233 = vrot.slane %v232, 1
        %v234 = vmax.f32 %v232, %v233
        %v235 = vsub.f32 %v209, %v228
        %v236 = vsub.f32 %v210, %v234
        %v237 = vmul.f32 %v235, 1.442695
        %v238 = vpow.pop %v237
        %v239 = vmul.f32 %v236, 1.442695
        %v240 = vpow.pop %v239
        %v241 = vadd.f32 %v238, 0.0
        %v242 = vadd.f32 %v240, 0.0
        %v243 = vld [vmem:[%s169] sm:$0xff]
        %v244 = vld [vmem:[%s169 + $0x8] sm:$0xff]
        %v245 = vmul.f32 %v243, %v238
        %v246 = vmul.f32 %v244, %v240
        %v247 = vadd.f32 %v245, 0.0
        %v248 = vadd.f32 %v246, 0.0
        %v249 = vld [vmem:[%s169 + $0x40] sm:$0xff]
        %v250 = vld [vmem:[%s169 + $0x48] sm:$0xff]
        %v251 = vmul.f32 %v249, %v238
        %v252 = vmul.f32 %v250, %v240
        %v253 = vadd.f32 %v251, 0.0
        %v254 = vadd.f32 %v252, 0.0
        %v255 = vsub.f32 %v211, %v228
        %v256 = vsub.f32 %v212, %v234
        %v257 = vmul.f32 %v255, 1.442695
        %v258 = vpow.pop %v257
        %v259 = vmul.f32 %v256, 1.442695
        %v260 = vpow.pop %v259
        %v261 = vadd.f32 %v241, %v258
        %v262 = vadd.f32 %v242, %v260
        %v263 = vld [vmem:[%s169 + $0x10] sm:$0xff]
        %v264 = vld [vmem:[%s169 + $0x18] sm:$0xff]
        %v265 = vmul.f32 %v263, %v258
        %v266 = vmul.f32 %v264, %v260
        %v267 = vadd.f32 %v247, %v265
        %v268 = vadd.f32 %v248, %v266
        %v269 = vld [vmem:[%s169 + $0x50] sm:$0xff]
        %v270 = vld [vmem:[%s169 + $0x58] sm:$0xff]
        %v271 = vmul.f32 %v269, %v258
        %v272 = vmul.f32 %v270, %v260
        %v273 = vadd.f32 %v253, %v271
        %v274 = vadd.f32 %v254, %v272
        %v275 = vsub.f32 %v215, %v228
        %v276 = vsub.f32 %v216, %v234
        %v277 = vmul.f32 %v275, 1.442695
        %v278 = vpow.pop %v277
        %v279 = vmul.f32 %v276, 1.442695
        %v280 = vpow.pop %v279
        %v281 = vadd.f32 %v261, %v278
        %v282 = vadd.f32 %v262, %v280
        %v283 = vld [vmem:[%s169 + $0x20] sm:$0xff]
        %v284 = vld [vmem:[%s169 + $0x28] sm:$0xff]
        %v285 = vmul.f32 %v283, %v278
        %v286 = vmul.f32 %v284, %v280
        %v287 = vadd.f32 %v267, %v285
        %v288 = vadd.f32 %v268, %v286
        %v289 = vld [vmem:[%s169 + $0x60] sm:$0xff]
        %v290 = vld [vmem:[%s169 + $0x68] sm:$0xff]
        %v291 = vmul.f32 %v289, %v278
        %v292 = vmul.f32 %v290, %v280
        %v293 = vadd.f32 %v273, %v291
        %v294 = vadd.f32 %v274, %v292
        %v295 = vsub.f32 %v219, %v228
        %v296 = vsub.f32 %v220, %v234
        %v297 = vmul.f32 %v295, 1.442695
        %v298 = vpow.pop %v297
        %v299 = vmul.f32 %v296, 1.442695
        %v300 = vpow.pop %v299
        %v301 = vadd.f32 %v281, %v298
        %v302 = vadd.f32 %v282, %v300
        %v303 = vld [vmem:[%s169 + $0x30] sm:$0xff]
        %v304 = vld [vmem:[%s169 + $0x38] sm:$0xff]
        %v305 = vmul.f32 %v303, %v298
        %v306 = vmul.f32 %v304, %v300
        %v307 = vadd.f32 %v287, %v305
        %v308 = vadd.f32 %v288, %v306
        %v309 = vld [vmem:[%s169 + $0x70] sm:$0xff]
        %v310 = vld [vmem:[%s169 + $0x78] sm:$0xff]
        %v311 = vmul.f32 %v309, %v298
        %v312 = vmul.f32 %v310, %v300
        %v313 = vadd.f32 %v293, %v311
        %v314 = vadd.f32 %v294, %v312
        %v315 = vrot.slane %v301, 4
        %v316 = vadd.f32 %v301, %v315
        %v317 = vrot.slane %v316, 2
        %v318 = vadd.f32 %v316, %v317
        %v319 = vrot.slane %v318, 1
        %v320 = vadd.f32 %v318, %v319
        %v321 = vrot.slane %v302, 4
        %v322 = vadd.f32 %v302, %v321
        %v323 = vrot.slane %v322, 2
        %v324 = vadd.f32 %v322, %v323
        %v325 = vrot.slane %v324, 1
        %v326 = vadd.f32 %v324, %v325
        %v327 = vrot.slane %v307, 4
        %v328 = vadd.f32 %v307, %v327
        %v329 = vrot.slane %v328, 2
        %v330 = vadd.f32 %v328, %v329
        %v331 = vrot.slane %v330, 1
        %v332 = vadd.f32 %v330, %v331
        %v333 = vrot.slane %v308, 4
        %v334 = vadd.f32 %v308, %v333
        %v335 = vrot.slane %v334, 2
        %v336 = vadd.f32 %v334, %v335
        %v337 = vrot.slane %v336, 1
        %v338 = vadd.f32 %v336, %v337
        %v339 = vrot.slane %v313, 4
        %v340 = vadd.f32 %v313, %v339
        %v341 = vrot.slane %v340, 2
        %v342 = vadd.f32 %v340, %v341
        %v343 = vrot.slane %v342, 1
        %v344 = vadd.f32 %v342, %v343
        %v345 = vrot.slane %v314, 4
        %v346 = vadd.f32 %v314, %v345
        %v347 = vrot.slane %v346, 2
        %v348 = vadd.f32 %v346, %v347
        %v349 = vrot.slane %v348, 1
        %v350 = vadd.f32 %v348, %v349
        %v351 = vrcp.pop %v320
        %v352 = vmul.f32 %v320, %v351
        %v353 = vsub.f32 1.0, %v352
        %v354 = vmul.f32 %v351, %v353
        %v355 = vadd.f32 %v351, %v354
        %vm356 = vweird.f32 %v320
        %vm357 = vweird.f32 %v351
        %vm358 = vmor %vm356, %vm357
        %v359 = vsel %vm358, %v351, %v355
        %v360 = vand.u32 2147483647, %v320
        %vm361 = vcmp.eq.f32.partialorder %v360, 8.507059e+37
        %v362 = vand.u32 %v320, 2147483648
        %v363 = vor.u32 1.1754944e-38, %v362
        %v364 = vsel %vm361, %v363, %v359
        %v365 = vrcp.pop %v326
        %v366 = vmul.f32 %v326, %v365
        %v367 = vsub.f32 1.0, %v366
        %v368 = vmul.f32 %v365, %v367
        %v369 = vadd.f32 %v365, %v368
        %vm370 = vweird.f32 %v326
        %vm371 = vweird.f32 %v365
        %vm372 = vmor %vm370, %vm371
        %v373 = vsel %vm372, %v365, %v369
        %v374 = vand.u32 2147483647, %v326
        %vm375 = vcmp.eq.f32.partialorder %v374, 8.507059e+37
        %v376 = vand.u32 %v326, 2147483648
        %v377 = vor.u32 1.1754944e-38, %v376
        %v378 = vsel %vm375, %v377, %v373
        %v379 = vmul.f32 %v332, %v364
        %v380 = vmul.f32 %v338, %v378
        %v383 = vrot.slane %v380, 7
        %vm384 = vcmask 1040384
        %v385 = vsel %vm384, %v379, %v383
        %v387 = vlaneseq
        %vm388 = vcmp.ge.s32.totalorder %v387, 0
        %vm389 = vcmp.lt.s32.totalorder %v387, 256
        %vm390 = vmand %vm388, %vm389
        %391 = vst.msk [vmem:[%s205] ss:$2 sm:$0x3] %vm390, %v385
        %v392 = vmul.f32 %v344, %v364
        %v393 = vmul.f32 %v350, %v378
        %v396 = vrot.slane %v393, 7
        %v397 = vsel %vm384, %v392, %v396
        %s399 = scalar_lea.vmem %s205, 1 [#allocation7]
        %400 = vst.msk [vmem:[%s399] ss:$2 sm:$0x3] %vm390, %v397
        %s401 = sand.u32 %s82, 1
        %s402 = scalar_lea.sflag [#allocation4], %s401
        %s403 = sand.u32 %s82, 1
        %s404 = smul.addr %s403, 4
        %s405 = scalar_lea.vmem [#allocation7], %s404
        // Predicated region
        $region37: #{tpu_custom_call.1} parent=27 // pred_check
          %p406 = pneg %p92
        $region38: #{tpu_custom_call.1} parent=27 // pred_check_branch
          %408 = sbr.rel (%p406) target = $region40
        $region39: #{tpu_custom_call.1} parent=27 // pred_region
          %s409 = smul.u32 2, %s22
          %411 = vsyncadd %s402, 0
          %s412 = smul.addr %s409, 2
          %s413 = scalar_lea.hbm %s2, %s412
          %s415 = sshll.u32 %s405, 4
          %s416 = int_to_ptr.vmem [resolvable:$true] %s415
          %s417 = sshll.u32 %s413, 4
          %s418 = int_to_ptr.hbm [resolvable:$true] %s417
          %420 = dma.vmem_to_hbm [thread:$0]  %s416, 64, %s418, %s402
        $region40: #{tpu_custom_call.1} parent=27 // pred_fallthru
          _
      $region28: #{tpu_custom_call.1} parent=5 // pred_fallthru
        _
      %p421 = scmp.le.s32.totalorder 2, %s17
      // Predicated region
      $region41: #{tpu_custom_call.1} parent=5 // pred_check
        %p422 = pneg %p421
      $region42: #{tpu_custom_call.1} parent=5 // pred_check_branch
        %424 = sbr.rel (%p422) target = $region44
      $region43: #{tpu_custom_call.1} parent=5 // pred_region
        %s425 = ssub.s32 %s17, 2
        // Predicated region
        $region45: #{tpu_custom_call.1} parent=43 // pred_check
          %p426 = pneg %p98
        $region46: #{tpu_custom_call.1} parent=43 // pred_check_branch
          %428 = sbr.rel (%p426) target = $region48
        $region47: #{tpu_custom_call.1} parent=43 // pred_region
          %s429 = sand.u32 %s83, 1
          %s430 = scalar_lea.sflag [#allocation4], %s429
          %s431 = sand.u32 %s83, 1
          %s432 = smul.addr %s431, 4
          %s433 = scalar_lea.vmem [#allocation7], %s432
          %435 = dma.done %s430, 64
        $region48: #{tpu_custom_call.1} parent=43 // pred_fallthru
          _
      $region44: #{tpu_custom_call.1} parent=5 // pred_fallthru
        _
    $region6: #{tpu_custom_call.1} parent=1 // loop_footer
      %s21 = sadd.s32 1, %s17
    $region7: #{tpu_custom_call.1} parent=1 // loop_footer_branch
      %16 = sbr.rel target = $region3
    $region8: #{tpu_custom_call.1} parent=1 // loop_exit
      _
    %436 = vsyncpa [#allocation3], 1
    %s437 = scalar_lea.sflag [#allocation3], 1
    %438 = vsyncpa %s437, 1
    %439 = vsyncpa [#allocation6], 1
    %s440 = scalar_lea.sflag [#allocation6], 1
    %441 = vsyncpa %s440, 1
    %442 = vsyncpa [#allocation4], 1
    %s443 = scalar_lea.sflag [#allocation4], 1
    %444 = vsyncpa %s443, 1

</llo_original>
